<compile_context>
chip_gen: v7x
topology: tpu7x:2x2x1
jax: 0.10.0
libtpu: 0.0.40
codegen_flags: <defaults>
</compile_context>

<pallas_src>
import jax
import jax.numpy as jnp
from jax.experimental import pallas as pl
from jax.experimental.pallas import tpu as pltpu

Z_DIM = 64
HIDDEN = 256
IMG_DIM = 28 * 28 * 1   # 784
TILE_B_MAX = 512        # batch tile for large batches (keeps grid >= 2 on v7x
                        # once B > 512; VMEM footprint ~2 x 0.9 MiB out bufs)


def _generator_kernel(x_ref, w1_ref, b1_ref, w2_ref, b2_ref, o_ref):
    # x:  (tile_b, Z_DIM)   bf16    w1: (Z_DIM, HIDDEN)   bf16   b1: (1, HIDDEN)  f32
    # w2: (HIDDEN, IMG_DIM) bf16    b2: (1, IMG_DIM)      f32    o:  (tile_b, IMG_DIM) bf16
    # Linear 1 on the MXU (bf16 inputs, f32 accumulation) + f32 bias
    h = jnp.dot(x_ref[...], w1_ref[...], preferred_element_type=jnp.float32)
    h = h + b1_ref[...]
    # LeakyReLU(0.01): single vmax per element
    h = jnp.maximum(h, 0.01 * h)
    # Linear 2 on the MXU (bf16 inputs, f32 accumulation) + f32 bias
    y = jnp.dot(h.astype(jnp.bfloat16), w2_ref[...],
                preferred_element_type=jnp.float32)
    y = y + b2_ref[...]
    # Tanh on the EUP (f32 for v5e compatibility), store bf16
    o_ref[...] = jnp.tanh(y).astype(o_ref.dtype)


def generator_forward(x, w1, b1, w2, b2):
    """x: (B, Z_DIM) f32 (cast to bf16 at the kernel boundary).
    w1: (Z_DIM, HIDDEN) bf16, b1: (1, HIDDEN) f32,
    w2: (HIDDEN, IMG_DIM) bf16, b2: (1, IMG_DIM) f32.
    Returns (B, IMG_DIM) bf16 (tanh output; bf16 keeps ~3 significant digits on
    the [-1, 1] range and halves HBM writeback)."""
    B = x.shape[0]
    x = x.astype(jnp.bfloat16)

    if B <= TILE_B_MAX:
        # Single full-array block; pad only to bf16 sublane granularity (16).
        b_pad = max(16, pl.cdiv(B, 16) * 16)
        tile_b = b_pad
    else:
        tile_b = TILE_B_MAX
        b_pad = pl.cdiv(B, tile_b) * tile_b

    if b_pad != B:
        x = jnp.pad(x, ((0, b_pad - B), (0, 0)))

    grid = (b_pad // tile_b,)

    bytes_accessed = (
        b_pad * Z_DIM * 2          # x (bf16)
        + Z_DIM * HIDDEN * 2       # w1 (bf16)
        + HIDDEN * 4               # b1 (f32)
        + HIDDEN * IMG_DIM * 2     # w2 (bf16)
        + IMG_DIM * 4              # b2 (f32)
        + b_pad * IMG_DIM * 2      # out (bf16)
    )
    cost = pl.CostEstimate(
        flops=2 * b_pad * (Z_DIM * HIDDEN + HIDDEN * IMG_DIM),
        transcendentals=b_pad * IMG_DIM,
        bytes_accessed=bytes_accessed,
    )

    out = pl.pallas_call(
        _generator_kernel,
        out_shape=jax.ShapeDtypeStruct((b_pad, IMG_DIM), jnp.bfloat16),
        grid=grid,
        in_specs=[
            # x tile moves with the batch grid (double-buffered behind compute)
            pl.BlockSpec((tile_b, Z_DIM), lambda i: (i, 0)),
            # weights / biases: same block every step -> resident in VMEM
            pl.BlockSpec((Z_DIM, HIDDEN), lambda i: (0, 0)),
            pl.BlockSpec((1, HIDDEN), lambda i: (0, 0)),
            pl.BlockSpec((HIDDEN, IMG_DIM), lambda i: (0, 0)),
            pl.BlockSpec((1, IMG_DIM), lambda i: (0, 0)),
        ],
        out_specs=pl.BlockSpec((tile_b, IMG_DIM), lambda i: (i, 0)),
        compiler_params=pltpu.CompilerParams(
            dimension_semantics=("parallel",),
        ),
        cost_estimate=cost,
    )(x, w1, b1, w2, b2)

    if b_pad != B:
        out = out[:B]   # row slice only when batch padding was needed
    return out


def init_generator_params(key):
    """PyTorch nn.Linear-style init: U(-1/sqrt(fan_in), 1/sqrt(fan_in)).
    Weights are stored pre-transposed as (in, out); matmul weights are bf16,
    biases stay f32."""
    k1, k2, k3, k4 = jax.random.split(key, 4)
    bound1 = 1.0 / jnp.sqrt(jnp.float32(Z_DIM))
    bound2 = 1.0 / jnp.sqrt(jnp.float32(HIDDEN))
    w1 = jax.random.uniform(k1, (Z_DIM, HIDDEN), jnp.float32, -bound1, bound1)
    b1 = jax.random.uniform(k2, (1, HIDDEN), jnp.float32, -bound1, bound1)
    w2 = jax.random.uniform(k3, (HIDDEN, IMG_DIM), jnp.float32, -bound2, bound2)
    b2 = jax.random.uniform(k4, (1, IMG_DIM), jnp.float32, -bound2, bound2)
    return (w1.astype(jnp.bfloat16), b1, w2.astype(jnp.bfloat16), b2)


def _reference_forward(x, w1_bf, b1, w2_bf, b2):
    """Pure-JAX reference matching the kernel's quantization points:
    bf16 x / h / weights into each matmul, f32 accumulation, f32 tanh."""
    x_q = x.astype(jnp.bfloat16).astype(jnp.float32)
    w1 = w1_bf.astype(jnp.float32)
    w2 = w2_bf.astype(jnp.float32)
    h = x_q @ w1 + b1
    h = jnp.maximum(h, 0.01 * h)
    h_q = h.astype(jnp.bfloat16).astype(jnp.float32)
    return jnp.tanh(h_q @ w2 + b2)


if __name__ == "__main__":
    key = jax.random.PRNGKey(0)
    kx, kp = jax.random.split(key)

    B = 8  # small batch of latent vectors
    x = jax.random.normal(kx, (B, Z_DIM), jnp.float32)
    w1, b1, w2, b2 = init_generator_params(kp)

    out = generator_forward(x, w1, b1, w2, b2)
    out = jax.block_until_ready(out)

    ref = _reference_forward(x, w1, b1, w2, b2)
    assert out.shape == (B, IMG_DIM)
    # bf16 MXU inputs + bf16 output store -> loosened tolerance vs. pure f32
    assert jnp.allclose(out.astype(jnp.float32), ref, atol=2e-2, rtol=2e-2), (
        float(jnp.max(jnp.abs(out.astype(jnp.float32) - ref))))

    print("KERNEL_OK")
</pallas_src>

<mosaic_0001>
module attributes {stable_mosaic.version = 11 : i64} {
  func.func @_generator_kernel(%arg0: i32, %arg1: memref<16x64xbf16, #tpu.memory_space<vmem>>, %arg2: memref<64x256xbf16, #tpu.memory_space<vmem>>, %arg3: memref<1x256xf32, #tpu.memory_space<vmem>>, %arg4: memref<256x784xbf16, #tpu.memory_space<vmem>>, %arg5: memref<1x784xf32, #tpu.memory_space<vmem>>, %arg6: memref<16x784xbf16, #tpu.memory_space<vmem>>) attributes {dimension_semantics = [#tpu.dimension_semantics<parallel>], iteration_bounds = array<i64: 1>, scalar_prefetch = 0 : i64, scratch_operands = 0 : i64, tpu.core_type = #tpu.core_type<tc>, window_params = [{transform_indices = @transform_0, window_bounds = array<i64: 16, 64>}, {pipeline_mode = #tpu.pipeline_mode<synchronous>, transform_indices = @transform_1, window_bounds = array<i64: 64, 256>}, {pipeline_mode = #tpu.pipeline_mode<synchronous>, transform_indices = @transform_2, window_bounds = array<i64: 1, 256>}, {pipeline_mode = #tpu.pipeline_mode<synchronous>, transform_indices = @transform_3, window_bounds = array<i64: 256, 784>}, {pipeline_mode = #tpu.pipeline_mode<synchronous>, transform_indices = @transform_4, window_bounds = array<i64: 1, 784>}, {transform_indices = @transform_5, window_bounds = array<i64: 16, 784>}]} {
    %c0 = arith.constant 0 : index
    %c0_0 = arith.constant 0 : index
    %0 = vector.load %arg1[%c0, %c0_0] : memref<16x64xbf16, #tpu.memory_space<vmem>>, vector<16x64xbf16>
    %c0_1 = arith.constant 0 : index
    %c0_2 = arith.constant 0 : index
    %1 = vector.load %arg2[%c0_1, %c0_2] : memref<64x256xbf16, #tpu.memory_space<vmem>>, vector<64x256xbf16>
    %cst = arith.constant dense<0.000000e+00> : vector<16x256xf32>
    %2 = tpu.matmul %0, %1, %cst {dimension_numbers = #tpu.dot_dimension_numbers<[1], [0], [0], [1], [0, 0, 1, 1], [], []>} : vector<16x64xbf16>, vector<64x256xbf16>, vector<16x256xf32> -> vector<16x256xf32>
    %c0_3 = arith.constant 0 : index
    %c0_4 = arith.constant 0 : index
    %3 = vector.load %arg3[%c0_3, %c0_4] : memref<1x256xf32, #tpu.memory_space<vmem>>, vector<1x256xf32>
    %4 = vector.broadcast %3 : vector<1x256xf32> to vector<16x256xf32>
    %5 = arith.addf %2, %4 : vector<16x256xf32>
    %cst_5 = arith.constant 0.00999999977 : f32
    %6 = vector.broadcast %cst_5 : f32 to vector<16x256xf32>
    %7 = arith.mulf %6, %5 : vector<16x256xf32>
    %8 = arith.maximumf %5, %7 : vector<16x256xf32>
    %9 = arith.truncf %8 : vector<16x256xf32> to vector<16x256xbf16>
    %c0_6 = arith.constant 0 : index
    %c0_7 = arith.constant 0 : index
    %10 = vector.load %arg4[%c0_6, %c0_7] : memref<256x784xbf16, #tpu.memory_space<vmem>>, vector<256x784xbf16>
    %cst_8 = arith.constant dense<0.000000e+00> : vector<16x784xf32>
    %11 = tpu.matmul %9, %10, %cst_8 {dimension_numbers = #tpu.dot_dimension_numbers<[1], [0], [0], [1], [0, 0, 1, 1], [], []>} : vector<16x256xbf16>, vector<256x784xbf16>, vector<16x784xf32> -> vector<16x784xf32>
    %c0_9 = arith.constant 0 : index
    %c0_10 = arith.constant 0 : index
    %12 = vector.load %arg5[%c0_9, %c0_10] : memref<1x784xf32, #tpu.memory_space<vmem>>, vector<1x784xf32>
    %13 = vector.broadcast %12 : vector<1x784xf32> to vector<16x784xf32>
    %14 = arith.addf %11, %13 : vector<16x784xf32>
    %15 = math.tanh %14 : vector<16x784xf32>
    %16 = arith.truncf %15 : vector<16x784xf32> to vector<16x784xbf16>
    %c0_11 = arith.constant 0 : index
    %c0_12 = arith.constant 0 : index
    %17 = vector.load %arg6[%c0_11, %c0_12] : memref<16x784xbf16, #tpu.memory_space<vmem>>, vector<16x784xbf16>
    tpu.vector_store %arg6[%c0_11, %c0_12], %16 {strides = array<i32>} : memref<16x784xbf16, #tpu.memory_space<vmem>>, vector<16x784xbf16>,
    return
  }
  func.func @transform_0(%arg0: i32) -> (i32, i32) {
    %c0_i32 = arith.constant 0 : i32
    %c0_i32_0 = arith.constant 0 : i32
    return %arg0, %c0_i32 : i32, i32
  }
  func.func @transform_1(%arg0: i32) -> (i32, i32) {
    %c0_i32 = arith.constant 0 : i32
    %c0_i32_0 = arith.constant 0 : i32
    %c0_i32_1 = arith.constant 0 : i32
    return %c0_i32, %c0_i32_0 : i32, i32
  }
  func.func @transform_2(%arg0: i32) -> (i32, i32) {
    %c0_i32 = arith.constant 0 : i32
    %c0_i32_0 = arith.constant 0 : i32
    %c0_i32_1 = arith.constant 0 : i32
    return %c0_i32, %c0_i32_0 : i32, i32
  }
  func.func @transform_3(%arg0: i32) -> (i32, i32) {
    %c0_i32 = arith.constant 0 : i32
    %c0_i32_0 = arith.constant 0 : i32
    %c0_i32_1 = arith.constant 0 : i32
    return %c0_i32, %c0_i32_0 : i32, i32
  }
  func.func @transform_4(%arg0: i32) -> (i32, i32) {
    %c0_i32 = arith.constant 0 : i32
    %c0_i32_0 = arith.constant 0 : i32
    %c0_i32_1 = arith.constant 0 : i32
    return %c0_i32, %c0_i32_0 : i32, i32
  }
  func.func @transform_5(%arg0: i32) -> (i32, i32) {
    %c0_i32 = arith.constant 0 : i32
    %c0_i32_0 = arith.constant 0 : i32
    return %arg0, %c0_i32 : i32, i32
  }
}

</mosaic_0001>

<llo_original>
// kernel: tpu_custom_call.1
$region0: #{tpu_custom_call.1}
  #allocation0 [shape = 'u32[]', space=smem, size = 0x4, offset = 0x4, fixed_abs, tag = 'smem constant byte address 0x4 - core index']
  #allocation1 [shape = 'u32[144,128]{1,0:T(1,128)}', space=vmem, size = 0x12000, scoped, tag = 'internal scratch']
  %s0 = inlined_call_operand.vmem [shape: bf16[16,64], index: 0, kind: input, shape index: {}]
  %s1 = inlined_call_operand.vmem [shape: bf16[64,256], index: 1, kind: input, shape index: {}]
  %s2 = inlined_call_operand.vmem [shape: f32[1,256], index: 2, kind: input, shape index: {}]
  %s3 = inlined_call_operand.vmem [shape: bf16[256,784], index: 3, kind: input, shape index: {}]
  %s4 = inlined_call_operand.vmem [shape: f32[1,784], index: 4, kind: input, shape index: {}]
  %s5 = inlined_call_operand.hbm [shape: bf16[16,784], index: 5, kind: output, shape index: {}]
  %s6 = sld [smem:[#allocation0]]
  $region30: #{tpu_custom_call.1} parent=0
    _
  %s8 = ssub.s32 1, %s6
  %s9 = scalar_select 0, %s8, %s6
  $region1: #{tpu_custom_call.1} parent=0
    #allocation2 [shape = 'u8[28672]{0}', space=vmem, size = 0x7000, scoped, tag = 'output window, operand 0, single buffered']
    #allocation3 [shape = 's32[1]{0}', space=sflag, size = 0x4, scoped, tag = 'scoped memory for tpu_custom_call.1']
    %10 = vsyncpa [#allocation3], 0
    // Predicated region
    $region2: #{tpu_custom_call.1} parent=1 // pred_check
      _
    $region3: #{tpu_custom_call.1} parent=1 // pred_check_branch
      %12 = sbr.rel (0) target = $region5
    $region4: #{tpu_custom_call.1} parent=1 // pred_region
      _
    $region5: #{tpu_custom_call.1} parent=1 // pred_fallthru
      _
    // Predicated region
    $region6: #{tpu_custom_call.1} parent=1 // pred_check
      _
    $region7: #{tpu_custom_call.1} parent=1 // pred_check_branch
      %14 = sbr.rel (0) target = $region9
    $region8: #{tpu_custom_call.1} parent=1 // pred_region
      _
    $region9: #{tpu_custom_call.1} parent=1 // pred_fallthru
      _
    // Predicated region
    $region10: #{tpu_custom_call.1} parent=1 // pred_check
      _
    $region11: #{tpu_custom_call.1} parent=1 // pred_check_branch
      %16 = sbr.rel (0) target = $region13
    $region12: #{tpu_custom_call.1} parent=1 // pred_region
      _
    $region13: #{tpu_custom_call.1} parent=1 // pred_fallthru
      _
    // Predicated region
    $region14: #{tpu_custom_call.1} parent=1 // pred_check
      _
    $region15: #{tpu_custom_call.1} parent=1 // pred_check_branch
      %18 = sbr.rel (0) target = $region17
    $region16: #{tpu_custom_call.1} parent=1 // pred_region
      _
    $region17: #{tpu_custom_call.1} parent=1 // pred_fallthru
      _
    // Predicated region
    $region18: #{tpu_custom_call.1} parent=1 // pred_check
      _
    $region19: #{tpu_custom_call.1} parent=1 // pred_check_branch
      %20 = sbr.rel (0) target = $region21
    $region20: #{tpu_custom_call.1} parent=1 // pred_region
      _
    $region21: #{tpu_custom_call.1} parent=1 // pred_fallthru
      _
    %v22 = vld [vmem:[%s0] sm:$0xf]
    %v23 = vld [vmem:[%s0 + $0x4] sm:$0xf]
    %v24 = vld [vmem:[%s1] sm:$0xff]
    %v25 = vld [vmem:[%s1 + $0x8] sm:$0xff]
    %v26 = vld [vmem:[%s1 + $0x10] sm:$0xff]
    %v27 = vld [vmem:[%s1 + $0x18] sm:$0xff]
    %v28 = vld [vmem:[%s1 + $0x20] sm:$0xff]
    %v29 = vld [vmem:[%s1 + $0x28] sm:$0xff]
    %v30 = vld [vmem:[%s1 + $0x30] sm:$0xff]
    %v31 = vld [vmem:[%s1 + $0x38] sm:$0xff]
    %v32 = vld [vmem:[%s2] sm:$0x3]
    %v34 = vlaneseq
    %v35 = vshrl.u32 %v34, 7
    %v36 = vsub.s32 0, %v35
    %v37 = vrot.slane %v32, %v36
    %v38 = vlaneseq
    %v39 = vshrl.u32 %v38, 7
    %v40 = vsub.s32 1, %v39
    %v41 = vrot.slane %v32, %v40
    %v46 = vunpack.c.l.b16 %v22
    %v47 = vunpack.c.l.b16 %v23
    %v48 = vpack.c.b16 %v47, %v46
    %v57 = vunpack.c.l.b16 %v24
    %v58 = vunpack.c.h.b16 %v24
    %v59 = vunpack.c.l.b16 %v25
    %v60 = vunpack.c.h.b16 %v25
    %v61 = vunpack.c.l.b16 %v26
    %v62 = vunpack.c.h.b16 %v26
    %v63 = vunpack.c.l.b16 %v27
    %v64 = vunpack.c.h.b16 %v27
    %v65 = vunpack.c.l.b16 %v28
    %v66 = vunpack.c.h.b16 %v28
    %v67 = vunpack.c.l.b16 %v29
    %v68 = vunpack.c.h.b16 %v29
    %v69 = vunpack.c.l.b16 %v30
    %v70 = vunpack.c.h.b16 %v30
    %v71 = vunpack.c.l.b16 %v31
    %v72 = vunpack.c.h.b16 %v31
    %v73 = vpack.c.b16 %v59, %v57
    %v74 = vpack.c.b16 %v60, %v58
    %v75 = vpack.c.b16 %v63, %v61
    %v76 = vpack.c.b16 %v64, %v62
    %v77 = vpack.c.b16 %v67, %v65
    %v78 = vpack.c.b16 %v68, %v66
    %v79 = vpack.c.b16 %v71, %v69
    %v80 = vpack.c.b16 %v72, %v70
    %vm89 = vcmask 523264
    %v91 = vsel %vm89, %v48, 0
    %93 = vmatprep.subr.bf16.mxu0 %v74
    %94 = vmatpush1.bf16.msra.mxu0 %v73
    %95 = vmatprep.subr.bf16.mxu0 %v76
    %96 = vmatpush1.bf16.msra.mxu0 %v75
    %97 = vmatprep.subr.bf16.mxu0 %v78
    %98 = vmatpush1.bf16.msra.mxu0 %v77
    %99 = vmatprep.subr.bf16.mxu0 %v80
    %100 = vmatpush1.bf16.msra.mxu0 %v79
    %101 = vmatprep.subr.bf16.mxu0 0
    %102 = vmatpush1.bf16.msra.mxu0 0
    %103 = vmatprep.subr.bf16.mxu0 0
    %104 = vmatpush1.bf16.msra.mxu0 0
    %105 = vmatprep.subr.bf16.mxu0 0
    %106 = vmatpush1.bf16.msra.mxu0 0
    %107 = vmatprep.subr.bf16.mxu0 0
    %108 = vmatpush1.bf16.msra.mxu0 0
    %109 = vmatprep.subr.bf16.mxu0 0
    %110 = vmatpush1.bf16.msra.mxu0 0
    %111 = vmatprep.subr.bf16.mxu0 0
    %112 = vmatpush1.bf16.msra.mxu0 0
    %113 = vmatprep.subr.bf16.mxu0 0
    %114 = vmatpush1.bf16.msra.mxu0 0
    %115 = vmatprep.subr.bf16.mxu0 0
    %116 = vmatpush1.bf16.msra.mxu0 0
    %117 = vmatprep.subr.bf16.mxu0 0
    %118 = vmatpush1.bf16.msra.mxu0 0
    %119 = vmatprep.subr.bf16.mxu0 0
    %120 = vmatpush1.bf16.msra.mxu0 0
    %121 = vmatprep.subr.bf16.mxu0 0
    %122 = vmatpush1.bf16.msra.mxu0 0
    %123 = vmatprep.subr.bf16.mxu0 0
    %124 = vmatpush1.bf16.msra.mxu0 0
    %125 = vmatprep.mubr.bf16.mxu0 0
    %126 = vmatmul.mubr.bf16.gmra.mrb[0].mxu0 %v91
    %v127 = vpop.f32.mrb[0].mxu0
    %v128 = vadd.f32 %v37, %v127
    %v129 = vpop.f32.mrb[0].mxu0
    %v130 = vadd.f32 %v41, %v129
    %v131 = vpop.f32.mrb[0].mxu0
    %v132 = vadd.f32 %v37, %v131
    %v133 = vpop.f32.mrb[0].mxu0
    %v134 = vadd.f32 %v41, %v133
    %135 = vdwg.mxu0
    %v136 = vmul.f32 %v128, 0.01
    %v137 = vmul.f32 %v130, 0.01
    %v138 = vmul.f32 %v132, 0.01
    %v139 = vmul.f32 %v134, 0.01
    %v140 = vmax.f32 %v128, %v136
    %v141 = vmax.f32 %v130, %v137
    %v142 = vmax.f32 %v132, %v138
    %v143 = vmax.f32 %v134, %v139
    %v144 = vpack.c.bf16 %v142, %v140
    %v145 = vpack.c.bf16 %v143, %v141
    %v146 = vld [vmem:[%s3] sm:$0xff]
    %v147 = vld [vmem:[%s3 + $0x8] sm:$0xff]
    %v148 = vld [vmem:[%s3 + $0x10] sm:$0xff]
    %v149 = vld [vmem:[%s3 + $0x18] sm:$0xf]
    %v150 = vld [vmem:[%s3 + $0x1c] sm:$0xff]
    %v151 = vld [vmem:[%s3 + $0x24] sm:$0xff]
    %v152 = vld [vmem:[%s3 + $0x2c] sm:$0xff]
    %v153 = vld [vmem:[%s3 + $0x34] sm:$0xf]
    %v154 = vld [vmem:[%s3 + $0x38] sm:$0xff]
    %v155 = vld [vmem:[%s3 + $0x40] sm:$0xff]
    %v156 = vld [vmem:[%s3 + $0x48] sm:$0xff]
    %v157 = vld [vmem:[%s3 + $0x50] sm:$0xf]
    %v158 = vld [vmem:[%s3 + $0x54] sm:$0xff]
    %v159 = vld [vmem:[%s3 + $0x5c] sm:$0xff]
    %v160 = vld [vmem:[%s3 + $0x64] sm:$0xff]
    %v161 = vld [vmem:[%s3 + $0x6c] sm:$0xf]
    %v162 = vld [vmem:[%s3 + $0x70] sm:$0xff]
    %v163 = vld [vmem:[%s3 + $0x78] sm:$0xff]
    %v164 = vld [vmem:[%s3 + $0x80] sm:$0xff]
    %v165 = vld [vmem:[%s3 + $0x88] sm:$0xf]
    %v166 = vld [vmem:[%s3 + $0x8c] sm:$0xff]
    %v167 = vld [vmem:[%s3 + $0x94] sm:$0xff]
    %v168 = vld [vmem:[%s3 + $0x9c] sm:$0xff]
    %v169 = vld [vmem:[%s3 + $0xa4] sm:$0xf]
    %v170 = vld [vmem:[%s3 + $0xa8] sm:$0xff]
    %v171 = vld [vmem:[%s3 + $0xb0] sm:$0xff]
    %v172 = vld [vmem:[%s3 + $0xb8] sm:$0xff]
    %v173 = vld [vmem:[%s3 + $0xc0] sm:$0xf]
    %v174 = vld [vmem:[%s3 + $0xc4] sm:$0xff]
    %v175 = vld [vmem:[%s3 + $0xcc] sm:$0xff]
    %v176 = vld [vmem:[%s3 + $0xd4] sm:$0xff]
    %v177 = vld [vmem:[%s3 + $0xdc] sm:$0xf]
    %v178 = vld [vmem:[%s3 + $0xe0] sm:$0xff]
    %v179 = vld [vmem:[%s3 + $0xe8] sm:$0xff]
    %v180 = vld [vmem:[%s3 + $0xf0] sm:$0xff]
    %v181 = vld [vmem:[%s3 + $0xf8] sm:$0xf]
    %v182 = vld [vmem:[%s3 + $0xfc] sm:$0xff]
    %v183 = vld [vmem:[%s3 + $0x104] sm:$0xff]
    %v184 = vld [vmem:[%s3 + $0x10c] sm:$0xff]
    %v185 = vld [vmem:[%s3 + $0x114] sm:$0xf]
    %v186 = vld [vmem:[%s3 + $0x118] sm:$0xff]
    %v187 = vld [vmem:[%s3 + $0x120] sm:$0xff]
    %v188 = vld [vmem:[%s3 + $0x128] sm:$0xff]
    %v189 = vld [vmem:[%s3 + $0x130] sm:$0xf]
    %v190 = vld [vmem:[%s3 + $0x134] sm:$0xff]
    %v191 = vld [vmem:[%s3 + $0x13c] sm:$0xff]
    %v192 = vld [vmem:[%s3 + $0x144] sm:$0xff]
    %v193 = vld [vmem:[%s3 + $0x14c] sm:$0xf]
    %v194 = vld [vmem:[%s3 + $0x150] sm:$0xff]
    %v195 = vld [vmem:[%s3 + $0x158] sm:$0xff]
    %v196 = vld [vmem:[%s3 + $0x160] sm:$0xff]
    %v197 = vld [vmem:[%s3 + $0x168] sm:$0xf]
    %v198 = vld [vmem:[%s3 + $0x16c] sm:$0xff]
    %v199 = vld [vmem:[%s3 + $0x174] sm:$0xff]
    %v200 = vld [vmem:[%s3 + $0x17c] sm:$0xff]
    %v201 = vld [vmem:[%s3 + $0x184] sm:$0xf]
    %v202 = vld [vmem:[%s3 + $0x188] sm:$0xff]
    %v203 = vld [vmem:[%s3 + $0x190] sm:$0xff]
    %v204 = vld [vmem:[%s3 + $0x198] sm:$0xff]
    %v205 = vld [vmem:[%s3 + $0x1a0] sm:$0xf]
    %v206 = vld [vmem:[%s3 + $0x1a4] sm:$0xff]
    %v207 = vld [vmem:[%s3 + $0x1ac] sm:$0xff]
    %v208 = vld [vmem:[%s3 + $0x1b4] sm:$0xff]
    %v209 = vld [vmem:[%s3 + $0x1bc] sm:$0xf]
    %v210 = vld [vmem:[%s3 + $0x1c0] sm:$0xff]
    %v211 = vld [vmem:[%s3 + $0x1c8] sm:$0xff]
    %v212 = vld [vmem:[%s3 + $0x1d0] sm:$0xff]
    %v213 = vld [vmem:[%s3 + $0x1d8] sm:$0xf]
    %v214 = vld [vmem:[%s3 + $0x1dc] sm:$0xff]
    %v215 = vld [vmem:[%s3 + $0x1e4] sm:$0xff]
    %v216 = vld [vmem:[%s3 + $0x1ec] sm:$0xff]
    %v217 = vld [vmem:[%s3 + $0x1f4] sm:$0xf]
    %v218 = vld [vmem:[%s3 + $0x1f8] sm:$0xff]
    %v219 = vld [vmem:[%s3 + $0x200] sm:$0xff]
    %v220 = vld [vmem:[%s3 + $0x208] sm:$0xff]
    %v221 = vld [vmem:[%s3 + $0x210] sm:$0xf]
    %v222 = vld [vmem:[%s3 + $0x214] sm:$0xff]
    %v223 = vld [vmem:[%s3 + $0x21c] sm:$0xff]
    %v224 = vld [vmem:[%s3 + $0x224] sm:$0xff]
    %v225 = vld [vmem:[%s3 + $0x22c] sm:$0xf]
    %v226 = vld [vmem:[%s3 + $0x230] sm:$0xff]
    %v227 = vld [vmem:[%s3 + $0x238] sm:$0xff]
    %v228 = vld [vmem:[%s3 + $0x240] sm:$0xff]
    %v229 = vld [vmem:[%s3 + $0x248] sm:$0xf]
    %v230 = vld [vmem:[%s3 + $0x24c] sm:$0xff]
    %v231 = vld [vmem:[%s3 + $0x254] sm:$0xff]
    %v232 = vld [vmem:[%s3 + $0x25c] sm:$0xff]
    %v233 = vld [vmem:[%s3 + $0x264] sm:$0xf]
    %v234 = vld [vmem:[%s3 + $0x268] sm:$0xff]
    %v235 = vld [vmem:[%s3 + $0x270] sm:$0xff]
    %v236 = vld [vmem:[%s3 + $0x278] sm:$0xff]
    %v237 = vld [vmem:[%s3 + $0x280] sm:$0xf]
    %v238 = vld [vmem:[%s3 + $0x284] sm:$0xff]
    %v239 = vld [vmem:[%s3 + $0x28c] sm:$0xff]
    %v240 = vld [vmem:[%s3 + $0x294] sm:$0xff]
    %v241 = vld [vmem:[%s3 + $0x29c] sm:$0xf]
    %v242 = vld [vmem:[%s3 + $0x2a0] sm:$0xff]
    %v243 = vld [vmem:[%s3 + $0x2a8] sm:$0xff]
    %v244 = vld [vmem:[%s3 + $0x2b0] sm:$0xff]
    %v245 = vld [vmem:[%s3 + $0x2b8] sm:$0xf]
    %v246 = vld [vmem:[%s3 + $0x2bc] sm:$0xff]
    %v247 = vld [vmem:[%s3 + $0x2c4] sm:$0xff]
    %v248 = vld [vmem:[%s3 + $0x2cc] sm:$0xff]
    %v249 = vld [vmem:[%s3 + $0x2d4] sm:$0xf]
    %v250 = vld [vmem:[%s3 + $0x2d8] sm:$0xff]
    %v251 = vld [vmem:[%s3 + $0x2e0] sm:$0xff]
    %v252 = vld [vmem:[%s3 + $0x2e8] sm:$0xff]
    %v253 = vld [vmem:[%s3 + $0x2f0] sm:$0xf]
    %v254 = vld [vmem:[%s3 + $0x2f4] sm:$0xff]
    %v255 = vld [vmem:[%s3 + $0x2fc] sm:$0xff]
    %v256 = vld [vmem:[%s3 + $0x304] sm:$0xff]
    %v257 = vld [vmem:[%s3 + $0x30c] sm:$0xf]
    %v258 = vld [vmem:[%s3 + $0x310] sm:$0xff]
    %v259 = vld [vmem:[%s3 + $0x318] sm:$0xff]
    %v260 = vld [vmem:[%s3 + $0x320] sm:$0xff]
    %v261 = vld [vmem:[%s3 + $0x328] sm:$0xf]
    %v262 = vld [vmem:[%s3 + $0x32c] sm:$0xff]
    %v263 = vld [vmem:[%s3 + $0x334] sm:$0xff]
    %v264 = vld [vmem:[%s3 + $0x33c] sm:$0xff]
    %v265 = vld [vmem:[%s3 + $0x344] sm:$0xf]
    %v266 = vld [vmem:[%s3 + $0x348] sm:$0xff]
    %v267 = vld [vmem:[%s3 + $0x350] sm:$0xff]
    %v268 = vld [vmem:[%s3 + $0x358] sm:$0xff]
    %v269 = vld [vmem:[%s3 + $0x360] sm:$0xf]
    %v270 = vld [vmem:[%s3 + $0x364] sm:$0xff]
    %v271 = vld [vmem:[%s3 + $0x36c] sm:$0xff]
    %v272 = vld [vmem:[%s3 + $0x374] sm:$0xff]
    %v273 = vld [vmem:[%s3 + $0x37c] sm:$0xf]
    %v274 = vld [vmem:[%s4] sm:$0x7f]
    %v276 = vlaneseq
    %v277 = vshrl.u32 %v276, 7
    %v278 = vsub.s32 0, %v277
    %v279 = vrot.slane %v274, %v278
    %v280 = vlaneseq
    %v281 = vshrl.u32 %v280, 7
    %v282 = vsub.s32 1, %v281
    %v283 = vrot.slane %v274, %v282
    %v284 = vlaneseq
    %v285 = vshrl.u32 %v284, 7
    %v286 = vsub.s32 2, %v285
    %v287 = vrot.slane %v274, %v286
    %v288 = vlaneseq
    %v289 = vshrl.u32 %v288, 7
    %v290 = vsub.s32 3, %v289
    %v291 = vrot.slane %v274, %v290
    %v292 = vlaneseq
    %v293 = vshrl.u32 %v292, 7
    %v294 = vsub.s32 4, %v293
    %v295 = vrot.slane %v274, %v294
    %v296 = vlaneseq
    %v297 = vshrl.u32 %v296, 7
    %v298 = vsub.s32 5, %v297
    %v299 = vrot.slane %v274, %v298
    %v300 = vlaneseq
    %v301 = vshrl.u32 %v300, 7
    %v302 = vsub.s32 6, %v301
    %v303 = vrot.slane %v274, %v302
    %v439 = vunpack.c.l.b16 %v146
    %v440 = vunpack.c.h.b16 %v146
    %v441 = vunpack.c.l.b16 %v147
    %v442 = vunpack.c.h.b16 %v147
    %v443 = vunpack.c.l.b16 %v148
    %v444 = vunpack.c.h.b16 %v148
    %v445 = vunpack.c.l.b16 %v149
    %v446 = vunpack.c.l.b16 %v150
    %v447 = vunpack.c.h.b16 %v150
    %v448 = vunpack.c.l.b16 %v151
    %v449 = vunpack.c.h.b16 %v151
    %v450 = vunpack.c.l.b16 %v152
    %v451 = vunpack.c.h.b16 %v152
    %v452 = vunpack.c.l.b16 %v153
    %v453 = vunpack.c.l.b16 %v154
    %v454 = vunpack.c.h.b16 %v154
    %v455 = vunpack.c.l.b16 %v155
    %v456 = vunpack.c.h.b16 %v155
    %v457 = vunpack.c.l.b16 %v156
    %v458 = vunpack.c.h.b16 %v156
    %v459 = vunpack.c.l.b16 %v157
    %v460 = vunpack.c.l.b16 %v158
    %v461 = vunpack.c.h.b16 %v158
    %v462 = vunpack.c.l.b16 %v159
    %v463 = vunpack.c.h.b16 %v159
    %v464 = vunpack.c.l.b16 %v160
    %v465 = vunpack.c.h.b16 %v160
    %v466 = vunpack.c.l.b16 %v161
    %v467 = vunpack.c.l.b16 %v162
    %v468 = vunpack.c.h.b16 %v162
    %v469 = vunpack.c.l.b16 %v163
    %v470 = vunpack.c.h.b16 %v163
    %v471 = vunpack.c.l.b16 %v164
    %v472 = vunpack.c.h.b16 %v164
    %v473 = vunpack.c.l.b16 %v165
    %v474 = vunpack.c.l.b16 %v166
    %v475 = vunpack.c.h.b16 %v166
    %v476 = vunpack.c.l.b16 %v167
    %v477 = vunpack.c.h.b16 %v167
    %v478 = vunpack.c.l.b16 %v168
    %v479 = vunpack.c.h.b16 %v168
    %v480 = vunpack.c.l.b16 %v169
    %v481 = vunpack.c.l.b16 %v170
    %v482 = vunpack.c.h.b16 %v170
    %v483 = vunpack.c.l.b16 %v171
    %v484 = vunpack.c.h.b16 %v171
    %v485 = vunpack.c.l.b16 %v172
    %v486 = vunpack.c.h.b16 %v172
    %v487 = vunpack.c.l.b16 %v173
    %v488 = vunpack.c.l.b16 %v174
    %v489 = vunpack.c.h.b16 %v174
    %v490 = vunpack.c.l.b16 %v175
    %v491 = vunpack.c.h.b16 %v175
    %v492 = vunpack.c.l.b16 %v176
    %v493 = vunpack.c.h.b16 %v176
    %v494 = vunpack.c.l.b16 %v177
    %v495 = vunpack.c.l.b16 %v178
    %v496 = vunpack.c.h.b16 %v178
    %v497 = vunpack.c.l.b16 %v179
    %v498 = vunpack.c.h.b16 %v179
    %v499 = vunpack.c.l.b16 %v180
    %v500 = vunpack.c.h.b16 %v180
    %v501 = vunpack.c.l.b16 %v181
    %v502 = vunpack.c.l.b16 %v182
    %v503 = vunpack.c.h.b16 %v182
    %v504 = vunpack.c.l.b16 %v183
    %v505 = vunpack.c.h.b16 %v183
    %v506 = vunpack.c.l.b16 %v184
    %v507 = vunpack.c.h.b16 %v184
    %v508 = vunpack.c.l.b16 %v185
    %v509 = vunpack.c.l.b16 %v186
    %v510 = vunpack.c.h.b16 %v186
    %v511 = vunpack.c.l.b16 %v187
    %v512 = vunpack.c.h.b16 %v187
    %v513 = vunpack.c.l.b16 %v188
    %v514 = vunpack.c.h.b16 %v188
    %v515 = vunpack.c.l.b16 %v189
    %v516 = vunpack.c.l.b16 %v190
    %v517 = vunpack.c.h.b16 %v190
    %v518 = vunpack.c.l.b16 %v191
    %v519 = vunpack.c.h.b16 %v191
    %v520 = vunpack.c.l.b16 %v192
    %v521 = vunpack.c.h.b16 %v192
    %v522 = vunpack.c.l.b16 %v193
    %v523 = vunpack.c.l.b16 %v194
    %v524 = vunpack.c.h.b16 %v194
    %v525 = vunpack.c.l.b16 %v195
    %v526 = vunpack.c.h.b16 %v195
    %v527 = vunpack.c.l.b16 %v196
    %v528 = vunpack.c.h.b16 %v196
    %v529 = vunpack.c.l.b16 %v197
    %v530 = vunpack.c.l.b16 %v198
    %v531 = vunpack.c.h.b16 %v198
    %v532 = vunpack.c.l.b16 %v199
    %v533 = vunpack.c.h.b16 %v199
    %v534 = vunpack.c.l.b16 %v200
    %v535 = vunpack.c.h.b16 %v200
    %v536 = vunpack.c.l.b16 %v201
    %v537 = vunpack.c.l.b16 %v202
    %v538 = vunpack.c.h.b16 %v202
    %v539 = vunpack.c.l.b16 %v203
    %v540 = vunpack.c.h.b16 %v203
    %v541 = vunpack.c.l.b16 %v204
    %v542 = vunpack.c.h.b16 %v204
    %v543 = vunpack.c.l.b16 %v205
    %v544 = vunpack.c.l.b16 %v206
    %v545 = vunpack.c.h.b16 %v206
    %v546 = vunpack.c.l.b16 %v207
    %v547 = vunpack.c.h.b16 %v207
    %v548 = vunpack.c.l.b16 %v208
    %v549 = vunpack.c.h.b16 %v208
    %v550 = vunpack.c.l.b16 %v209
    %v551 = vunpack.c.l.b16 %v210
    %v552 = vunpack.c.h.b16 %v210
    %v553 = vunpack.c.l.b16 %v211
    %v554 = vunpack.c.h.b16 %v211
    %v555 = vunpack.c.l.b16 %v212
    %v556 = vunpack.c.h.b16 %v212
    %v557 = vunpack.c.l.b16 %v213
    %v558 = vunpack.c.l.b16 %v214
    %v559 = vunpack.c.h.b16 %v214
    %v560 = vunpack.c.l.b16 %v215
    %v561 = vunpack.c.h.b16 %v215
    %v562 = vunpack.c.l.b16 %v216
    %v563 = vunpack.c.h.b16 %v216
    %v564 = vunpack.c.l.b16 %v217
    %v565 = vunpack.c.l.b16 %v218
    %v566 = vunpack.c.h.b16 %v218
    %v567 = vunpack.c.l.b16 %v219
    %v568 = vunpack.c.h.b16 %v219
    %v569 = vunpack.c.l.b16 %v220
    %v570 = vunpack.c.h.b16 %v220
    %v571 = vunpack.c.l.b16 %v221
    %v572 = vunpack.c.l.b16 %v222
    %v573 = vunpack.c.h.b16 %v222
    %v574 = vunpack.c.l.b16 %v223
    %v575 = vunpack.c.h.b16 %v223
    %v576 = vunpack.c.l.b16 %v224
    %v577 = vunpack.c.h.b16 %v224
    %v578 = vunpack.c.l.b16 %v225
    %v579 = vunpack.c.l.b16 %v226
    %v580 = vunpack.c.h.b16 %v226
    %v581 = vunpack.c.l.b16 %v227
    %v582 = vunpack.c.h.b16 %v227
    %v583 = vunpack.c.l.b16 %v228
    %v584 = vunpack.c.h.b16 %v228
    %v585 = vunpack.c.l.b16 %v229
    %v586 = vunpack.c.l.b16 %v230
    %v587 = vunpack.c.h.b16 %v230
    %v588 = vunpack.c.l.b16 %v231
    %v589 = vunpack.c.h.b16 %v231
    %v590 = vunpack.c.l.b16 %v232
    %v591 = vunpack.c.h.b16 %v232
    %v592 = vunpack.c.l.b16 %v233
    %v593 = vunpack.c.l.b16 %v234
    %v594 = vunpack.c.h.b16 %v234
    %v595 = vunpack.c.l.b16 %v235
    %v596 = vunpack.c.h.b16 %v235
    %v597 = vunpack.c.l.b16 %v236
    %v598 = vunpack.c.h.b16 %v236
    %v599 = vunpack.c.l.b16 %v237
    %v600 = vunpack.c.l.b16 %v238
    %v601 = vunpack.c.h.b16 %v238
    %v602 = vunpack.c.l.b16 %v239
    %v603 = vunpack.c.h.b16 %v239
    %v604 = vunpack.c.l.b16 %v240
    %v605 = vunpack.c.h.b16 %v240
    %v606 = vunpack.c.l.b16 %v241
    %v607 = vunpack.c.l.b16 %v242
    %v608 = vunpack.c.h.b16 %v242
    %v609 = vunpack.c.l.b16 %v243
    %v610 = vunpack.c.h.b16 %v243
    %v611 = vunpack.c.l.b16 %v244
    %v612 = vunpack.c.h.b16 %v244
    %v613 = vunpack.c.l.b16 %v245
    %v614 = vunpack.c.l.b16 %v246
    %v615 = vunpack.c.h.b16 %v246
    %v616 = vunpack.c.l.b16 %v247
    %v617 = vunpack.c.h.b16 %v247
    %v618 = vunpack.c.l.b16 %v248
    %v619 = vunpack.c.h.b16 %v248
    %v620 = vunpack.c.l.b16 %v249
    %v621 = vunpack.c.l.b16 %v250
    %v622 = vunpack.c.h.b16 %v250
    %v623 = vunpack.c.l.b16 %v251
    %v624 = vunpack.c.h.b16 %v251
    %v625 = vunpack.c.l.b16 %v252
    %v626 = vunpack.c.h.b16 %v252
    %v627 = vunpack.c.l.b16 %v253
    %v628 = vunpack.c.l.b16 %v254
    %v629 = vunpack.c.h.b16 %v254
    %v630 = vunpack.c.l.b16 %v255
    %v631 = vunpack.c.h.b16 %v255
    %v632 = vunpack.c.l.b16 %v256
    %v633 = vunpack.c.h.b16 %v256
    %v634 = vunpack.c.l.b16 %v257
    %v635 = vunpack.c.l.b16 %v258
    %v636 = vunpack.c.h.b16 %v258
    %v637 = vunpack.c.l.b16 %v259
    %v638 = vunpack.c.h.b16 %v259
    %v639 = vunpack.c.l.b16 %v260
    %v640 = vunpack.c.h.b16 %v260
    %v641 = vunpack.c.l.b16 %v261
    %v642 = vunpack.c.l.b16 %v262
    %v643 = vunpack.c.h.b16 %v262
    %v644 = vunpack.c.l.b16 %v263
    %v645 = vunpack.c.h.b16 %v263
    %v646 = vunpack.c.l.b16 %v264
    %v647 = vunpack.c.h.b16 %v264
    %v648 = vunpack.c.l.b16 %v265
    %v649 = vunpack.c.l.b16 %v266
    %v650 = vunpack.c.h.b16 %v266
    %v651 = vunpack.c.l.b16 %v267
    %v652 = vunpack.c.h.b16 %v267
    %v653 = vunpack.c.l.b16 %v268
    %v654 = vunpack.c.h.b16 %v268
    %v655 = vunpack.c.l.b16 %v269
    %v656 = vunpack.c.l.b16 %v270
    %v657 = vunpack.c.h.b16 %v270
    %v658 = vunpack.c.l.b16 %v271
    %v659 = vunpack.c.h.b16 %v271
    %v660 = vunpack.c.l.b16 %v272
    %v661 = vunpack.c.h.b16 %v272
    %v662 = vunpack.c.l.b16 %v273
    %v663 = vpack.c.b16 %v446, %v439
    %v664 = vpack.c.b16 %v447, %v440
    %v665 = vpack.c.b16 %v448, %v441
    %v666 = vpack.c.b16 %v449, %v442
    %v667 = vpack.c.b16 %v450, %v443
    %v668 = vpack.c.b16 %v451, %v444
    %v669 = vpack.c.b16 %v452, %v445
    %v670 = vpack.c.b16 %v460, %v453
    %v671 = vpack.c.b16 %v461, %v454
    %v672 = vpack.c.b16 %v462, %v455
    %v673 = vpack.c.b16 %v463, %v456
    %v674 = vpack.c.b16 %v464, %v457
    %v675 = vpack.c.b16 %v465, %v458
    %v676 = vpack.c.b16 %v466, %v459
    %v677 = vpack.c.b16 %v474, %v467
    %v678 = vpack.c.b16 %v475, %v468
    %v679 = vpack.c.b16 %v476, %v469
    %v680 = vpack.c.b16 %v477, %v470
    %v681 = vpack.c.b16 %v478, %v471
    %v682 = vpack.c.b16 %v479, %v472
    %v683 = vpack.c.b16 %v480, %v473
    %v684 = vpack.c.b16 %v488, %v481
    %v685 = vpack.c.b16 %v489, %v482
    %v686 = vpack.c.b16 %v490, %v483
    %v687 = vpack.c.b16 %v491, %v484
    %v688 = vpack.c.b16 %v492, %v485
    %v689 = vpack.c.b16 %v493, %v486
    %v690 = vpack.c.b16 %v494, %v487
    %v691 = vpack.c.b16 %v502, %v495
    %v692 = vpack.c.b16 %v503, %v496
    %v693 = vpack.c.b16 %v504, %v497
    %v694 = vpack.c.b16 %v505, %v498
    %v695 = vpack.c.b16 %v506, %v499
    %v696 = vpack.c.b16 %v507, %v500
    %v697 = vpack.c.b16 %v508, %v501
    %v698 = vpack.c.b16 %v516, %v509
    %v699 = vpack.c.b16 %v517, %v510
    %v700 = vpack.c.b16 %v518, %v511
    %v701 = vpack.c.b16 %v519, %v512
    %v702 = vpack.c.b16 %v520, %v513
    %v703 = vpack.c.b16 %v521, %v514
    %v704 = vpack.c.b16 %v522, %v515
    %v705 = vpack.c.b16 %v530, %v523
    %v706 = vpack.c.b16 %v531, %v524
    %v707 = vpack.c.b16 %v532, %v525
    %v708 = vpack.c.b16 %v533, %v526
    %v709 = vpack.c.b16 %v534, %v527
    %v710 = vpack.c.b16 %v535, %v528
    %v711 = vpack.c.b16 %v536, %v529
    %v712 = vpack.c.b16 %v544, %v537
    %v713 = vpack.c.b16 %v545, %v538
    %v714 = vpack.c.b16 %v546, %v539
    %v715 = vpack.c.b16 %v547, %v540
    %v716 = vpack.c.b16 %v548, %v541
    %v717 = vpack.c.b16 %v549, %v542
    %v718 = vpack.c.b16 %v550, %v543
    %v719 = vpack.c.b16 %v558, %v551
    %v720 = vpack.c.b16 %v559, %v552
    %v721 = vpack.c.b16 %v560, %v553
    %v722 = vpack.c.b16 %v561, %v554
    %v723 = vpack.c.b16 %v562, %v555
    %v724 = vpack.c.b16 %v563, %v556
    %v725 = vpack.c.b16 %v564, %v557
    %v726 = vpack.c.b16 %v572, %v565
    %v727 = vpack.c.b16 %v573, %v566
    %v728 = vpack.c.b16 %v574, %v567
    %v729 = vpack.c.b16 %v575, %v568
    %v730 = vpack.c.b16 %v576, %v569
    %v731 = vpack.c.b16 %v577, %v570
    %v732 = vpack.c.b16 %v578, %v571
    %v733 = vpack.c.b16 %v586, %v579
    %v734 = vpack.c.b16 %v587, %v580
    %v735 = vpack.c.b16 %v588, %v581
    %v736 = vpack.c.b16 %v589, %v582
    %v737 = vpack.c.b16 %v590, %v583
    %v738 = vpack.c.b16 %v591, %v584
    %v739 = vpack.c.b16 %v592, %v585
    %v740 = vpack.c.b16 %v600, %v593
    %v741 = vpack.c.b16 %v601, %v594
    %v742 = vpack.c.b16 %v602, %v595
    %v743 = vpack.c.b16 %v603, %v596
    %v744 = vpack.c.b16 %v604, %v597
    %v745 = vpack.c.b16 %v605, %v598
    %v746 = vpack.c.b16 %v606, %v599
    %v747 = vpack.c.b16 %v614, %v607
    %v748 = vpack.c.b16 %v615, %v608
    %v749 = vpack.c.b16 %v616, %v609
    %v750 = vpack.c.b16 %v617, %v610
    %v751 = vpack.c.b16 %v618, %v611
    %v752 = vpack.c.b16 %v619, %v612
    %v753 = vpack.c.b16 %v620, %v613
    %v754 = vpack.c.b16 %v628, %v621
    %v755 = vpack.c.b16 %v629, %v622
    %v756 = vpack.c.b16 %v630, %v623
    %v757 = vpack.c.b16 %v631, %v624
    %v758 = vpack.c.b16 %v632, %v625
    %v759 = vpack.c.b16 %v633, %v626
    %v760 = vpack.c.b16 %v634, %v627
    %v761 = vpack.c.b16 %v642, %v635
    %v762 = vpack.c.b16 %v643, %v636
    %v763 = vpack.c.b16 %v644, %v637
    %v764 = vpack.c.b16 %v645, %v638
    %v765 = vpack.c.b16 %v646, %v639
    %v766 = vpack.c.b16 %v647, %v640
    %v767 = vpack.c.b16 %v648, %v641
    %v768 = vpack.c.b16 %v656, %v649
    %v769 = vpack.c.b16 %v657, %v650
    %v770 = vpack.c.b16 %v658, %v651
    %v771 = vpack.c.b16 %v659, %v652
    %v772 = vpack.c.b16 %v660, %v653
    %v773 = vpack.c.b16 %v661, %v654
    %v774 = vpack.c.b16 %v662, %v655
    %887 = vmatprep.subr.bf16.mxu0 %v664
    %888 = vmatpush1.bf16.msra.mxu0 %v663
    %889 = vmatprep.subr.bf16.mxu0 %v671
    %890 = vmatpush1.bf16.msra.mxu0 %v670
    %891 = vmatprep.subr.bf16.mxu0 %v678
    %892 = vmatpush1.bf16.msra.mxu0 %v677
    %893 = vmatprep.subr.bf16.mxu0 %v685
    %894 = vmatpush1.bf16.msra.mxu0 %v684
    %895 = vmatprep.subr.bf16.mxu0 %v692
    %896 = vmatpush1.bf16.msra.mxu0 %v691
    %897 = vmatprep.subr.bf16.mxu0 %v699
    %898 = vmatpush1.bf16.msra.mxu0 %v698
    %899 = vmatprep.subr.bf16.mxu0 %v706
    %900 = vmatpush1.bf16.msra.mxu0 %v705
    %901 = vmatprep.subr.bf16.mxu0 %v713
    %902 = vmatpush1.bf16.msra.mxu0 %v712
    %903 = vmatprep.subr.bf16.mxu0 %v720
    %904 = vmatpush1.bf16.msra.mxu0 %v719
    %905 = vmatprep.subr.bf16.mxu0 %v727
    %906 = vmatpush1.bf16.msra.mxu0 %v726
    %907 = vmatprep.subr.bf16.mxu0 %v734
    %908 = vmatpush1.bf16.msra.mxu0 %v733
    %909 = vmatprep.subr.bf16.mxu0 %v741
    %910 = vmatpush1.bf16.msra.mxu0 %v740
    %911 = vmatprep.subr.bf16.mxu0 %v748
    %912 = vmatpush1.bf16.msra.mxu0 %v747
    %913 = vmatprep.subr.bf16.mxu0 %v755
    %914 = vmatpush1.bf16.msra.mxu0 %v754
    %915 = vmatprep.subr.bf16.mxu0 %v762
    %916 = vmatpush1.bf16.msra.mxu0 %v761
    %917 = vmatprep.subr.bf16.mxu0 %v769
    %918 = vmatpush1.bf16.msra.mxu0 %v768
    %919 = vmatprep.mubr.bf16.mxu0 %v145
    %920 = vmatmul.mubr.bf16.gmra.mrb[0].mxu0 %v144
    %v921 = vpop.f32.mrb[0].mxu0
    %v922 = vadd.f32 %v279, %v921
    %v923 = vpop.f32.mrb[0].mxu0
    %v924 = vadd.f32 %v283, %v923
    %v925 = vpop.f32.mrb[0].mxu0
    %v926 = vadd.f32 %v279, %v925
    %v927 = vpop.f32.mrb[0].mxu0
    %v928 = vadd.f32 %v283, %v927
    %929 = vdwg.mxu0
    %930 = vmatprep.subr.bf16.mxu0 %v666
    %931 = vmatpush1.bf16.msra.mxu0 %v665
    %932 = vmatprep.subr.bf16.mxu0 %v673
    %933 = vmatpush1.bf16.msra.mxu0 %v672
    %934 = vmatprep.subr.bf16.mxu0 %v680
    %935 = vmatpush1.bf16.msra.mxu0 %v679
    %936 = vmatprep.subr.bf16.mxu0 %v687
    %937 = vmatpush1.bf16.msra.mxu0 %v686
    %938 = vmatprep.subr.bf16.mxu0 %v694
    %939 = vmatpush1.bf16.msra.mxu0 %v693
    %940 = vmatprep.subr.bf16.mxu0 %v701
    %941 = vmatpush1.bf16.msra.mxu0 %v700
    %942 = vmatprep.subr.bf16.mxu0 %v708
    %943 = vmatpush1.bf16.msra.mxu0 %v707
    %944 = vmatprep.subr.bf16.mxu0 %v715
    %945 = vmatpush1.bf16.msra.mxu0 %v714
    %946 = vmatprep.subr.bf16.mxu0 %v722
    %947 = vmatpush1.bf16.msra.mxu0 %v721
    %948 = vmatprep.subr.bf16.mxu0 %v729
    %949 = vmatpush1.bf16.msra.mxu0 %v728
    %950 = vmatprep.subr.bf16.mxu0 %v736
    %951 = vmatpush1.bf16.msra.mxu0 %v735
    %952 = vmatprep.subr.bf16.mxu0 %v743
    %953 = vmatpush1.bf16.msra.mxu0 %v742
    %954 = vmatprep.subr.bf16.mxu0 %v750
    %955 = vmatpush1.bf16.msra.mxu0 %v749
    %956 = vmatprep.subr.bf16.mxu0 %v757
    %957 = vmatpush1.bf16.msra.mxu0 %v756
    %958 = vmatprep.subr.bf16.mxu0 %v764
    %959 = vmatpush1.bf16.msra.mxu0 %v763
    %960 = vmatprep.subr.bf16.mxu0 %v771
    %961 = vmatpush1.bf16.msra.mxu0 %v770
    %962 = vmatprep.mubr.bf16.mxu0 %v145
    %963 = vmatmul.mubr.bf16.gmra.mrb[0].mxu0 %v144
    %v964 = vpop.f32.mrb[0].mxu0
    %v965 = vadd.f32 %v287, %v964
    %v966 = vpop.f32.mrb[0].mxu0
    %v967 = vadd.f32 %v291, %v966
    %v968 = vpop.f32.mrb[0].mxu0
    %v969 = vadd.f32 %v287, %v968
    %v970 = vpop.f32.mrb[0].mxu0
    %v971 = vadd.f32 %v291, %v970
    %972 = vdwg.mxu0
    %973 = vmatprep.subr.bf16.mxu0 %v668
    %974 = vmatpush1.bf16.msra.mxu0 %v667
    %975 = vmatprep.subr.bf16.mxu0 %v675
    %976 = vmatpush1.bf16.msra.mxu0 %v674
    %977 = vmatprep.subr.bf16.mxu0 %v682
    %978 = vmatpush1.bf16.msra.mxu0 %v681
    %979 = vmatprep.subr.bf16.mxu0 %v689
    %980 = vmatpush1.bf16.msra.mxu0 %v688
    %981 = vmatprep.subr.bf16.mxu0 %v696
    %982 = vmatpush1.bf16.msra.mxu0 %v695
    %983 = vmatprep.subr.bf16.mxu0 %v703
    %984 = vmatpush1.bf16.msra.mxu0 %v702
    %985 = vmatprep.subr.bf16.mxu0 %v710
    %986 = vmatpush1.bf16.msra.mxu0 %v709
    %987 = vmatprep.subr.bf16.mxu0 %v717
    %988 = vmatpush1.bf16.msra.mxu0 %v716
    %989 = vmatprep.subr.bf16.mxu0 %v724
    %990 = vmatpush1.bf16.msra.mxu0 %v723
    %991 = vmatprep.subr.bf16.mxu0 %v731
    %992 = vmatpush1.bf16.msra.mxu0 %v730
    %993 = vmatprep.subr.bf16.mxu0 %v738
    %994 = vmatpush1.bf16.msra.mxu0 %v737
    %995 = vmatprep.subr.bf16.mxu0 %v745
    %996 = vmatpush1.bf16.msra.mxu0 %v744
    %997 = vmatprep.subr.bf16.mxu0 %v752
    %998 = vmatpush1.bf16.msra.mxu0 %v751
    %999 = vmatprep.subr.bf16.mxu0 %v759
    %1000 = vmatpush1.bf16.msra.mxu0 %v758
    %1001 = vmatprep.subr.bf16.mxu0 %v766
    %1002 = vmatpush1.bf16.msra.mxu0 %v765
    %1003 = vmatprep.subr.bf16.mxu0 %v773
    %1004 = vmatpush1.bf16.msra.mxu0 %v772
    %1005 = vmatprep.mubr.bf16.mxu0 %v145
    %1006 = vmatmul.mubr.bf16.gmra.mrb[0].mxu0 %v144
    %v1007 = vpop.f32.mrb[0].mxu0
    %v1008 = vadd.f32 %v295, %v1007
    %v1009 = vpop.f32.mrb[0].mxu0
    %v1010 = vadd.f32 %v299, %v1009
    %v1011 = vpop.f32.mrb[0].mxu0
    %v1012 = vadd.f32 %v295, %v1011
    %v1013 = vpop.f32.mrb[0].mxu0
    %v1014 = vadd.f32 %v299, %v1013
    %1015 = vdwg.mxu0
    %1016 = vmatprep.subr.bf16.mxu0 0
    %1017 = vmatpush1.bf16.msra.mxu0 %v669
    %1018 = vmatprep.subr.bf16.mxu0 0
    %1019 = vmatpush1.bf16.msra.mxu0 %v676
    %1020 = vmatprep.subr.bf16.mxu0 0
    %1021 = vmatpush1.bf16.msra.mxu0 %v683
    %1022 = vmatprep.subr.bf16.mxu0 0
    %1023 = vmatpush1.bf16.msra.mxu0 %v690
    %1024 = vmatprep.subr.bf16.mxu0 0
    %1025 = vmatpush1.bf16.msra.mxu0 %v697
    %1026 = vmatprep.subr.bf16.mxu0 0
    %1027 = vmatpush1.bf16.msra.mxu0 %v704
    %1028 = vmatprep.subr.bf16.mxu0 0
    %1029 = vmatpush1.bf16.msra.mxu0 %v711
    %1030 = vmatprep.subr.bf16.mxu0 0
    %1031 = vmatpush1.bf16.msra.mxu0 %v718
    %1032 = vmatprep.subr.bf16.mxu0 0
    %1033 = vmatpush1.bf16.msra.mxu0 %v725
    %1034 = vmatprep.subr.bf16.mxu0 0
    %1035 = vmatpush1.bf16.msra.mxu0 %v732
    %1036 = vmatprep.subr.bf16.mxu0 0
    %1037 = vmatpush1.bf16.msra.mxu0 %v739
    %1038 = vmatprep.subr.bf16.mxu0 0
    %1039 = vmatpush1.bf16.msra.mxu0 %v746
    %1040 = vmatprep.subr.bf16.mxu0 0
    %1041 = vmatpush1.bf16.msra.mxu0 %v753
    %1042 = vmatprep.subr.bf16.mxu0 0
    %1043 = vmatpush1.bf16.msra.mxu0 %v760
    %1044 = vmatprep.subr.bf16.mxu0 0
    %1045 = vmatpush1.bf16.msra.mxu0 %v767
    %1046 = vmatprep.subr.bf16.mxu0 0
    %1047 = vmatpush1.bf16.msra.mxu0 %v774
    %1048 = vmatprep.mubr.bf16.mxu0 %v145
    %1049 = vmatmul.mubr.bf16.gmra.mrb[0].mxu0 %v144
    %v1050 = vpop.f32.mrb[0].mxu0
    %v1051 = vadd.f32 %v303, %v1050
    %v1052 = vpop.f32.mrb[0].mxu0
    %v1053 = vpop.f32.mrb[0].mxu0
    %v1054 = vadd.f32 %v303, %v1053
    %v1055 = vpop.f32.mrb[0].mxu0
    %1056 = vdwg.mxu0
    %v1057 = vtanh.pop %v922
    %v1058 = vtanh.pop %v924
    %v1059 = vtanh.pop %v965
    %v1060 = vtanh.pop %v967
    %v1061 = vtanh.pop %v1008
    %v1062 = vtanh.pop %v1010
    %v1063 = vtanh.pop %v1051
    %v1064 = vtanh.pop %v926
    %v1065 = vtanh.pop %v928
    %v1066 = vtanh.pop %v969
    %v1067 = vtanh.pop %v971
    %v1068 = vtanh.pop %v1012
    %v1069 = vtanh.pop %v1014
    %v1070 = vtanh.pop %v1054
    %v1071 = vpack.c.bf16 %v1064, %v1057
    %v1072 = vpack.c.bf16 %v1065, %v1058
    %v1073 = vpack.c.bf16 %v1066, %v1059
    %v1074 = vpack.c.bf16 %v1067, %v1060
    %v1075 = vpack.c.bf16 %v1068, %v1061
    %v1076 = vpack.c.bf16 %v1069, %v1062
    %v1077 = vpack.c.bf16 %v1070, %v1063
    %v1085 = vunpack.c.l.b16 %v1071
    %v1086 = vunpack.c.l.b16 %v1072
    %v1087 = vunpack.c.l.b16 %v1073
    %v1088 = vunpack.c.l.b16 %v1074
    %v1089 = vunpack.c.l.b16 %v1075
    %v1090 = vunpack.c.l.b16 %v1076
    %v1091 = vunpack.c.l.b16 %v1077
    %v1092 = vunpack.c.h.b16 %v1071
    %v1093 = vunpack.c.h.b16 %v1072
    %v1094 = vunpack.c.h.b16 %v1073
    %v1095 = vunpack.c.h.b16 %v1074
    %v1096 = vunpack.c.h.b16 %v1075
    %v1097 = vunpack.c.h.b16 %v1076
    %v1098 = vunpack.c.h.b16 %v1077
    %v1099 = vpack.c.b16 %v1086, %v1085
    %v1100 = vpack.c.b16 %v1088, %v1087
    %v1101 = vpack.c.b16 %v1090, %v1089
    %v1102 = vpack.c.b16 %v1091, %v1091
    %v1103 = vpack.c.b16 %v1093, %v1092
    %v1104 = vpack.c.b16 %v1095, %v1094
    %v1105 = vpack.c.b16 %v1097, %v1096
    %v1106 = vpack.c.b16 %v1098, %v1098
    %1115 = vst [vmem:[#allocation2] sm:$0xff] %v1099
    %1116 = vst [vmem:[#allocation2 + $0x8] sm:$0xff] %v1100
    %1117 = vst [vmem:[#allocation2 + $0x10] sm:$0xff] %v1101
    %vm1118 = vcmask 125952
    %1119 = vst.msk [vmem:[#allocation2 + $0x18] sm:$0xf] %vm1118, %v1102
    %1120 = vst [vmem:[#allocation2 + $0x1c] sm:$0xff] %v1103
    %1121 = vst [vmem:[#allocation2 + $0x24] sm:$0xff] %v1104
    %1122 = vst [vmem:[#allocation2 + $0x2c] sm:$0xff] %v1105
    %1123 = vst.msk [vmem:[#allocation2 + $0x34] sm:$0xf] %vm1118, %v1106
    // Predicated region
    $region22: #{tpu_custom_call.1} parent=1 // pred_check
      _
    $region23: #{tpu_custom_call.1} parent=1 // pred_check_branch
      %1125 = sbr.rel (0) target = $region25
    $region24: #{tpu_custom_call.1} parent=1 // pred_region
      %s1127 = ssub.s32 896, 896
      %1128 = vsyncadd [#allocation3], %s1127
      %s1129 = sshll.u32 [#allocation2], 4
      %s1130 = int_to_ptr.vmem [resolvable:$true] %s1129
      %1135 = dma.vmem_to_hbm [thread:$0]  %s1130, 896, %s5, [#allocation3], 448, 448, 28
    $region25: #{tpu_custom_call.1} parent=1 // pred_fallthru
      _
    // Predicated region
    $region26: #{tpu_custom_call.1} parent=1 // pred_check
      _
    $region27: #{tpu_custom_call.1} parent=1 // pred_check_branch
      %1137 = sbr.rel (0) target = $region29
    $region28: #{tpu_custom_call.1} parent=1 // pred_region
      %1138 = dma.done [#allocation3], 896
    $region29: #{tpu_custom_call.1} parent=1 // pred_fallthru
      _
    %1139 = vsyncpa [#allocation3], 1

</llo_original>
